<compile_context>
chip_gen: v7x
topology: tpu7x:2x2x1
jax: 0.10.0
libtpu: 0.0.40
codegen_flags: <defaults>
</compile_context>

<pallas_src>
import jax
import jax.numpy as jnp
from jax.experimental import pallas as pl
from jax.experimental.pallas import tpu as pltpu

PACK = 128               # logical rows packed into one lane-dense row
LANES = 4 * PACK         # 512 f32 lanes per packed input row
TILE_PACKED_ROWS = 1024  # packed rows per grid step (= 131072 logical rows)


def mydense_kernel(x_ref, s_ref, o_ref):
    # x_ref: (tm, 512) packed rows; s_ref: (512, 128) weight-embedded
    # selection matrix; o_ref: (tm, 128) packed outputs.  One MXU matmul.
    o_ref[...] = jnp.dot(
        x_ref[...], s_ref[...], preferred_element_type=jnp.float32
    ).astype(o_ref.dtype)


def mydense_forward(x, weights, *, tile_packed_rows=TILE_PACKED_ROWS):
    """x: (N, 4) f32; weights: [W0 (4,4), W1 (4,4), W2 (4,4), W3 (4,1)]."""
    n = x.shape[0]

    # Fold the linear chain into a single (4,) vector (exact up to f32
    # reassociation) -- removes 3 of the 4 matmuls and all intermediates.
    w = weights[0]
    for wi in weights[1:]:
        w = w @ wi
    w = w.reshape(4).astype(jnp.float32)

    # Weight-embedded selection matrix: S[4c + f, c] = w[f].
    s = jnp.kron(jnp.eye(PACK, dtype=jnp.float32), w.reshape(4, 1))

    # Pad N so it packs into an integer number of (tm, 512) tiles, then
    # reshape row-major to the lane-dense packed layout.
    rows_packed = pl.cdiv(n, PACK)
    tm = min(tile_packed_rows, rows_packed)
    grid_m = pl.cdiv(rows_packed, tm)
    n_pad = grid_m * tm * PACK
    x_pad = jnp.pad(x, ((0, n_pad - n), (0, 0)))
    x_packed = x_pad.reshape(grid_m * tm, LANES)

    out_packed = pl.pallas_call(
        mydense_kernel,
        out_shape=jax.ShapeDtypeStruct((grid_m * tm, PACK), x.dtype),
        grid=(grid_m,),
        in_specs=[
            pl.BlockSpec((tm, LANES), lambda i: (i, 0)),    # streamed x tiles
            pl.BlockSpec((LANES, PACK), lambda i: (0, 0)),  # resident S
        ],
        out_specs=pl.BlockSpec((tm, PACK), lambda i: (i, 0)),
        compiler_params=pltpu.CompilerParams(
            dimension_semantics=("parallel",),      # 2x on v7x dual-TC
            vmem_limit_bytes=32 * 1024 * 1024,      # safe on v5e/v6e/v7x
        ),
    )(x_packed, s)

    # Back to (N, 1), dropping pad rows.
    return out_packed.reshape(n_pad, 1)[:n]


def init_params(key):
    """Deterministic stand-in for nn.Parameter(torch.randn(...))."""
    k0, k1, k2, k3 = jax.random.split(key, 4)
    return [
        jax.random.normal(k0, (4, 4), dtype=jnp.float32),
        jax.random.normal(k1, (4, 4), dtype=jnp.float32),
        jax.random.normal(k2, (4, 4), dtype=jnp.float32),
        jax.random.normal(k3, (4, 1), dtype=jnp.float32),
    ]


if __name__ == "__main__":
    key = jax.random.PRNGKey(0)
    k_params, k_x1, k_x2 = jax.random.split(key, 3)

    weights = init_params(k_params)
    fwd = jax.jit(mydense_forward)

    # Small batch (pads to one packed row) and a non-multiple-of-128 batch.
    for kx, n in ((k_x1, 8), (k_x2, 300)):
        x = jax.random.normal(kx, (n, 4), dtype=jnp.float32)
        out = jax.block_until_ready(fwd(x, weights))

        # Reference: the original chained matmul in plain JAX.
        ref = x
        for wi in weights:
            ref = ref @ wi

        assert out.shape == (n, 1)
        assert jnp.allclose(out, ref, atol=1e-4, rtol=1e-4)

    print("KERNEL_OK")
</pallas_src>

<mosaic_0001>
module attributes {stable_mosaic.version = 11 : i64} {
  func.func @mydense_kernel(%arg0: i32, %arg1: memref<1x512xf32, #tpu.memory_space<vmem>>, %arg2: memref<512x128xf32, #tpu.memory_space<vmem>>, %arg3: memref<1x128xf32, #tpu.memory_space<vmem>>) attributes {dimension_semantics = [#tpu.dimension_semantics<parallel>], iteration_bounds = array<i64: 1>, scalar_prefetch = 0 : i64, scratch_operands = 0 : i64, tpu.core_type = #tpu.core_type<tc>, window_params = [{transform_indices = @transform_0, window_bounds = array<i64: 1, 512>}, {pipeline_mode = #tpu.pipeline_mode<synchronous>, transform_indices = @transform_1, window_bounds = array<i64: 512, 128>}, {transform_indices = @transform_2, window_bounds = array<i64: 1, 128>}]} {
    %c0 = arith.constant 0 : index
    %c0_0 = arith.constant 0 : index
    %0 = vector.load %arg1[%c0, %c0_0] : memref<1x512xf32, #tpu.memory_space<vmem>>, vector<1x512xf32>
    %c0_1 = arith.constant 0 : index
    %c0_2 = arith.constant 0 : index
    %1 = vector.load %arg2[%c0_1, %c0_2] : memref<512x128xf32, #tpu.memory_space<vmem>>, vector<512x128xf32>
    %cst = arith.constant dense<0.000000e+00> : vector<1x128xf32>
    %2 = tpu.matmul %0, %1, %cst {dimension_numbers = #tpu.dot_dimension_numbers<[1], [0], [0], [1], [0, 0, 1, 1], [], []>} : vector<1x512xf32>, vector<512x128xf32>, vector<1x128xf32> -> vector<1x128xf32>
    %c0_3 = arith.constant 0 : index
    %c0_4 = arith.constant 0 : index
    %3 = vector.load %arg3[%c0_3, %c0_4] : memref<1x128xf32, #tpu.memory_space<vmem>>, vector<1x128xf32>
    tpu.vector_store %arg3[%c0_3, %c0_4], %2 {strides = array<i32>} : memref<1x128xf32, #tpu.memory_space<vmem>>, vector<1x128xf32>,
    return
  }
  func.func @transform_0(%arg0: i32) -> (i32, i32) {
    %c0_i32 = arith.constant 0 : i32
    %c0_i32_0 = arith.constant 0 : i32
    return %arg0, %c0_i32 : i32, i32
  }
  func.func @transform_1(%arg0: i32) -> (i32, i32) {
    %c0_i32 = arith.constant 0 : i32
    %c0_i32_0 = arith.constant 0 : i32
    %c0_i32_1 = arith.constant 0 : i32
    return %c0_i32, %c0_i32_0 : i32, i32
  }
  func.func @transform_2(%arg0: i32) -> (i32, i32) {
    %c0_i32 = arith.constant 0 : i32
    %c0_i32_0 = arith.constant 0 : i32
    return %arg0, %c0_i32 : i32, i32
  }
}

</mosaic_0001>

<llo_original>
// kernel: mydense_forward.1
$region0: #{mydense_forward.1}
  #allocation0 [shape = 'u32[]', space=smem, size = 0x4, offset = 0x4, fixed_abs, tag = 'smem constant byte address 0x4 - core index']
  #allocation1 [shape = 'u32[144,128]{1,0:T(1,128)}', space=vmem, size = 0x12000, scoped, tag = 'internal scratch']
  %s0 = inlined_call_operand.vmem [shape: f32[1,512], index: 0, kind: input, shape index: {}]
  %s1 = inlined_call_operand.vmem [shape: f32[512,128], index: 1, kind: input, shape index: {}]
  %s2 = inlined_call_operand.vmem [shape: f32[1,128], index: 2, kind: output, shape index: {}]
  %s3 = sld [smem:[#allocation0]]
  $region18: #{mydense_forward.1} parent=0
    _
  %s5 = ssub.s32 1, %s3
  %s6 = scalar_select 0, %s5, %s3
  // Predicated region
  $region2: #{mydense_forward.1} parent=0 // pred_check
    _
  $region3: #{mydense_forward.1} parent=0 // pred_check_branch
    %8 = sbr.rel (0) target = $region5
  $region4: #{mydense_forward.1} parent=0 // pred_region
    _
  $region5: #{mydense_forward.1} parent=0 // pred_fallthru
    _
  // Predicated region
  $region6: #{mydense_forward.1} parent=0 // pred_check
    _
  $region7: #{mydense_forward.1} parent=0 // pred_check_branch
    %10 = sbr.rel (0) target = $region9
  $region8: #{mydense_forward.1} parent=0 // pred_region
    _
  $region9: #{mydense_forward.1} parent=0 // pred_fallthru
    _
  %v11 = vld [vmem:[%s0] sm:$0xf]
  %v12 = vld [vmem:[%s1] sm:$0xff]
  %v13 = vld [vmem:[%s1 + $0x8] sm:$0xff]
  %v14 = vld [vmem:[%s1 + $0x10] sm:$0xff]
  %v15 = vld [vmem:[%s1 + $0x18] sm:$0xff]
  %v16 = vld [vmem:[%s1 + $0x20] sm:$0xff]
  %v17 = vld [vmem:[%s1 + $0x28] sm:$0xff]
  %v18 = vld [vmem:[%s1 + $0x30] sm:$0xff]
  %v19 = vld [vmem:[%s1 + $0x38] sm:$0xff]
  %v20 = vld [vmem:[%s1 + $0x40] sm:$0xff]
  %v21 = vld [vmem:[%s1 + $0x48] sm:$0xff]
  %v22 = vld [vmem:[%s1 + $0x50] sm:$0xff]
  %v23 = vld [vmem:[%s1 + $0x58] sm:$0xff]
  %v24 = vld [vmem:[%s1 + $0x60] sm:$0xff]
  %v25 = vld [vmem:[%s1 + $0x68] sm:$0xff]
  %v26 = vld [vmem:[%s1 + $0x70] sm:$0xff]
  %v27 = vld [vmem:[%s1 + $0x78] sm:$0xff]
  %v28 = vld [vmem:[%s1 + $0x80] sm:$0xff]
  %v29 = vld [vmem:[%s1 + $0x88] sm:$0xff]
  %v30 = vld [vmem:[%s1 + $0x90] sm:$0xff]
  %v31 = vld [vmem:[%s1 + $0x98] sm:$0xff]
  %v32 = vld [vmem:[%s1 + $0xa0] sm:$0xff]
  %v33 = vld [vmem:[%s1 + $0xa8] sm:$0xff]
  %v34 = vld [vmem:[%s1 + $0xb0] sm:$0xff]
  %v35 = vld [vmem:[%s1 + $0xb8] sm:$0xff]
  %v36 = vld [vmem:[%s1 + $0xc0] sm:$0xff]
  %v37 = vld [vmem:[%s1 + $0xc8] sm:$0xff]
  %v38 = vld [vmem:[%s1 + $0xd0] sm:$0xff]
  %v39 = vld [vmem:[%s1 + $0xd8] sm:$0xff]
  %v40 = vld [vmem:[%s1 + $0xe0] sm:$0xff]
  %v41 = vld [vmem:[%s1 + $0xe8] sm:$0xff]
  %v42 = vld [vmem:[%s1 + $0xf0] sm:$0xff]
  %v43 = vld [vmem:[%s1 + $0xf8] sm:$0xff]
  %v44 = vld [vmem:[%s1 + $0x100] sm:$0xff]
  %v45 = vld [vmem:[%s1 + $0x108] sm:$0xff]
  %v46 = vld [vmem:[%s1 + $0x110] sm:$0xff]
  %v47 = vld [vmem:[%s1 + $0x118] sm:$0xff]
  %v48 = vld [vmem:[%s1 + $0x120] sm:$0xff]
  %v49 = vld [vmem:[%s1 + $0x128] sm:$0xff]
  %v50 = vld [vmem:[%s1 + $0x130] sm:$0xff]
  %v51 = vld [vmem:[%s1 + $0x138] sm:$0xff]
  %v52 = vld [vmem:[%s1 + $0x140] sm:$0xff]
  %v53 = vld [vmem:[%s1 + $0x148] sm:$0xff]
  %v54 = vld [vmem:[%s1 + $0x150] sm:$0xff]
  %v55 = vld [vmem:[%s1 + $0x158] sm:$0xff]
  %v56 = vld [vmem:[%s1 + $0x160] sm:$0xff]
  %v57 = vld [vmem:[%s1 + $0x168] sm:$0xff]
  %v58 = vld [vmem:[%s1 + $0x170] sm:$0xff]
  %v59 = vld [vmem:[%s1 + $0x178] sm:$0xff]
  %v60 = vld [vmem:[%s1 + $0x180] sm:$0xff]
  %v61 = vld [vmem:[%s1 + $0x188] sm:$0xff]
  %v62 = vld [vmem:[%s1 + $0x190] sm:$0xff]
  %v63 = vld [vmem:[%s1 + $0x198] sm:$0xff]
  %v64 = vld [vmem:[%s1 + $0x1a0] sm:$0xff]
  %v65 = vld [vmem:[%s1 + $0x1a8] sm:$0xff]
  %v66 = vld [vmem:[%s1 + $0x1b0] sm:$0xff]
  %v67 = vld [vmem:[%s1 + $0x1b8] sm:$0xff]
  %v68 = vld [vmem:[%s1 + $0x1c0] sm:$0xff]
  %v69 = vld [vmem:[%s1 + $0x1c8] sm:$0xff]
  %v70 = vld [vmem:[%s1 + $0x1d0] sm:$0xff]
  %v71 = vld [vmem:[%s1 + $0x1d8] sm:$0xff]
  %v72 = vld [vmem:[%s1 + $0x1e0] sm:$0xff]
  %v73 = vld [vmem:[%s1 + $0x1e8] sm:$0xff]
  %v74 = vld [vmem:[%s1 + $0x1f0] sm:$0xff]
  %v75 = vld [vmem:[%s1 + $0x1f8] sm:$0xff]
  %v77 = vlaneseq
  %v78 = vshrl.u32 %v77, 7
  %v79 = vsub.s32 0, %v78
  %v80 = vrot.slane %v11, %v79
  %v81 = vlaneseq
  %v82 = vshrl.u32 %v81, 7
  %v83 = vsub.s32 1, %v82
  %v84 = vrot.slane %v11, %v83
  %v85 = vlaneseq
  %v86 = vshrl.u32 %v85, 7
  %v87 = vsub.s32 2, %v86
  %v88 = vrot.slane %v11, %v87
  %v89 = vlaneseq
  %v90 = vshrl.u32 %v89, 7
  %v91 = vsub.s32 3, %v90
  %v92 = vrot.slane %v11, %v91
  %97 = vmatprep.subr.mxu0 0.0
  %98 = vmatpush1.msra.mxu0 %v12
  %99 = vmatprep.subr.mxu0 0.0
  %100 = vmatpush1.msra.mxu0 %v13
  %101 = vmatprep.subr.mxu0 0.0
  %102 = vmatpush1.msra.mxu0 %v14
  %103 = vmatprep.subr.mxu0 0.0
  %104 = vmatpush1.msra.mxu0 %v15
  %105 = vmatprep.subr.mxu0 0.0
  %106 = vmatpush1.msra.mxu0 %v16
  %107 = vmatprep.subr.mxu0 0.0
  %108 = vmatpush1.msra.mxu0 %v17
  %109 = vmatprep.subr.mxu0 0.0
  %110 = vmatpush1.msra.mxu0 %v18
  %111 = vmatprep.subr.mxu0 0.0
  %112 = vmatpush1.msra.mxu0 %v19
  %113 = vmatprep.subr.mxu0 0.0
  %114 = vmatpush1.msra.mxu0 %v20
  %115 = vmatprep.subr.mxu0 0.0
  %116 = vmatpush1.msra.mxu0 %v21
  %117 = vmatprep.subr.mxu0 0.0
  %118 = vmatpush1.msra.mxu0 %v22
  %119 = vmatprep.subr.mxu0 0.0
  %120 = vmatpush1.msra.mxu0 %v23
  %121 = vmatprep.subr.mxu0 0.0
  %122 = vmatpush1.msra.mxu0 %v24
  %123 = vmatprep.subr.mxu0 0.0
  %124 = vmatpush1.msra.mxu0 %v25
  %125 = vmatprep.subr.mxu0 0.0
  %126 = vmatpush1.msra.mxu0 %v26
  %127 = vmatprep.subr.mxu0 0.0
  %128 = vmatpush1.msra.mxu0 %v27
  %129 = vmatprep.subr.mxu0 0.0
  %130 = vmatpush1.msra.mxu0 %v28
  %131 = vmatprep.subr.mxu0 0.0
  %132 = vmatpush1.msra.mxu0 %v29
  %133 = vmatprep.subr.mxu0 0.0
  %134 = vmatpush1.msra.mxu0 %v30
  %135 = vmatprep.subr.mxu0 0.0
  %136 = vmatpush1.msra.mxu0 %v31
  %137 = vmatprep.subr.mxu0 0.0
  %138 = vmatpush1.msra.mxu0 %v32
  %139 = vmatprep.subr.mxu0 0.0
  %140 = vmatpush1.msra.mxu0 %v33
  %141 = vmatprep.subr.mxu0 0.0
  %142 = vmatpush1.msra.mxu0 %v34
  %143 = vmatprep.subr.mxu0 0.0
  %144 = vmatpush1.msra.mxu0 %v35
  %145 = vmatprep.subr.mxu0 0.0
  %146 = vmatpush1.msra.mxu0 %v36
  %147 = vmatprep.subr.mxu0 0.0
  %148 = vmatpush1.msra.mxu0 %v37
  %149 = vmatprep.subr.mxu0 0.0
  %150 = vmatpush1.msra.mxu0 %v38
  %151 = vmatprep.subr.mxu0 0.0
  %152 = vmatpush1.msra.mxu0 %v39
  %153 = vmatprep.subr.mxu0 0.0
  %154 = vmatpush1.msra.mxu0 %v40
  %155 = vmatprep.subr.mxu0 0.0
  %156 = vmatpush1.msra.mxu0 %v41
  %157 = vmatprep.subr.mxu0 0.0
  %158 = vmatpush1.msra.mxu0 %v42
  %159 = vmatprep.subr.mxu0 0.0
  %160 = vmatpush1.msra.mxu0 %v43
  %161 = vmatprep.mubr.f32.mxu0 %v84
  %162 = vmatmul.mubr.f32.gmra.mrb[0].mxu0 %v80
  %v163 = vpop.f32.mrb[0].mxu0
  %v164 = vadd.f32 0.0, %v163
  %v165 = vpop.f32.mrb[0].mxu0
  %166 = vdwg.mxu0
  %167 = vmatprep.subr.mxu0 0.0
  %168 = vmatpush1.msra.mxu0 %v44
  %169 = vmatprep.subr.mxu0 0.0
  %170 = vmatpush1.msra.mxu0 %v45
  %171 = vmatprep.subr.mxu0 0.0
  %172 = vmatpush1.msra.mxu0 %v46
  %173 = vmatprep.subr.mxu0 0.0
  %174 = vmatpush1.msra.mxu0 %v47
  %175 = vmatprep.subr.mxu0 0.0
  %176 = vmatpush1.msra.mxu0 %v48
  %177 = vmatprep.subr.mxu0 0.0
  %178 = vmatpush1.msra.mxu0 %v49
  %179 = vmatprep.subr.mxu0 0.0
  %180 = vmatpush1.msra.mxu0 %v50
  %181 = vmatprep.subr.mxu0 0.0
  %182 = vmatpush1.msra.mxu0 %v51
  %183 = vmatprep.subr.mxu0 0.0
  %184 = vmatpush1.msra.mxu0 %v52
  %185 = vmatprep.subr.mxu0 0.0
  %186 = vmatpush1.msra.mxu0 %v53
  %187 = vmatprep.subr.mxu0 0.0
  %188 = vmatpush1.msra.mxu0 %v54
  %189 = vmatprep.subr.mxu0 0.0
  %190 = vmatpush1.msra.mxu0 %v55
  %191 = vmatprep.subr.mxu0 0.0
  %192 = vmatpush1.msra.mxu0 %v56
  %193 = vmatprep.subr.mxu0 0.0
  %194 = vmatpush1.msra.mxu0 %v57
  %195 = vmatprep.subr.mxu0 0.0
  %196 = vmatpush1.msra.mxu0 %v58
  %197 = vmatprep.subr.mxu0 0.0
  %198 = vmatpush1.msra.mxu0 %v59
  %199 = vmatprep.subr.mxu0 0.0
  %200 = vmatpush1.msra.mxu0 %v60
  %201 = vmatprep.subr.mxu0 0.0
  %202 = vmatpush1.msra.mxu0 %v61
  %203 = vmatprep.subr.mxu0 0.0
  %204 = vmatpush1.msra.mxu0 %v62
  %205 = vmatprep.subr.mxu0 0.0
  %206 = vmatpush1.msra.mxu0 %v63
  %207 = vmatprep.subr.mxu0 0.0
  %208 = vmatpush1.msra.mxu0 %v64
  %209 = vmatprep.subr.mxu0 0.0
  %210 = vmatpush1.msra.mxu0 %v65
  %211 = vmatprep.subr.mxu0 0.0
  %212 = vmatpush1.msra.mxu0 %v66
  %213 = vmatprep.subr.mxu0 0.0
  %214 = vmatpush1.msra.mxu0 %v67
  %215 = vmatprep.subr.mxu0 0.0
  %216 = vmatpush1.msra.mxu0 %v68
  %217 = vmatprep.subr.mxu0 0.0
  %218 = vmatpush1.msra.mxu0 %v69
  %219 = vmatprep.subr.mxu0 0.0
  %220 = vmatpush1.msra.mxu0 %v70
  %221 = vmatprep.subr.mxu0 0.0
  %222 = vmatpush1.msra.mxu0 %v71
  %223 = vmatprep.subr.mxu0 0.0
  %224 = vmatpush1.msra.mxu0 %v72
  %225 = vmatprep.subr.mxu0 0.0
  %226 = vmatpush1.msra.mxu0 %v73
  %227 = vmatprep.subr.mxu0 0.0
  %228 = vmatpush1.msra.mxu0 %v74
  %229 = vmatprep.subr.mxu0 0.0
  %230 = vmatpush1.msra.mxu0 %v75
  %231 = vmatprep.mubr.f32.mxu0 %v92
  %232 = vmatmul.mubr.f32.gmra.mrb[0].mxu0 %v88
  %v233 = vpop.f32.mrb[0].mxu0
  %v234 = vadd.f32 %v164, %v233
  %v235 = vpop.f32.mrb[0].mxu0
  %236 = vdwg.mxu0
  %237 = vst [vmem:[%s2] sm:$0x1] %v234
  // Predicated region
  $region10: #{mydense_forward.1} parent=0 // pred_check
    _
  $region11: #{mydense_forward.1} parent=0 // pred_check_branch
    %239 = sbr.rel (0) target = $region13
  $region12: #{mydense_forward.1} parent=0 // pred_region
    _
  $region13: #{mydense_forward.1} parent=0 // pred_fallthru
    _
  // Predicated region
  $region14: #{mydense_forward.1} parent=0 // pred_check
    _
  $region15: #{mydense_forward.1} parent=0 // pred_check_branch
    %241 = sbr.rel (0) target = $region17
  $region16: #{mydense_forward.1} parent=0 // pred_region
    _
  $region17: #{mydense_forward.1} parent=0 // pred_fallthru
    _

</llo_original>
